<compile_context>
chip_gen: v5e
topology: v5e:2x2
jax: 0.10.0
libtpu: 0.0.40
codegen_flags: <defaults>
</compile_context>

<pallas_src>
import jax
import jax.numpy as jnp
from jax.experimental import pallas as pl
from jax.experimental.pallas import tpu as pltpu


def ann_kernel(x_ref, w1_ref, b1_ref, w2_ref, b2_ref, w3_ref, b3_ref, o_ref):
    # In-kernel bf16 cast of the activation tile (x is f32 in HBM/VMEM).
    x = x_ref[...].astype(jnp.bfloat16)

    # hidden1: bf16 operands, f32 accumulate; bias + ReLU in f32 on the VPU.
    h1 = jnp.dot(x, w1_ref[...], preferred_element_type=jnp.float32)
    h1 = jnp.maximum(h1 + b1_ref[...], 0.0)

    # hidden2: cast activation back to bf16 for the MXU, accumulate in f32.
    h2 = jnp.dot(h1.astype(jnp.bfloat16), w2_ref[...],
                 preferred_element_type=jnp.float32)
    h2 = jnp.maximum(h2 + b2_ref[...], 0.0)

    # output head (128 -> 1): MXU matmul (the MXU has slack here; an XLU lane
    # reduction would become the binding slot at large batch tiles).
    logits = jnp.dot(h2.astype(jnp.bfloat16), w3_ref[...],
                     preferred_element_type=jnp.float32) + b3_ref[0]
    o_ref[...] = jax.nn.sigmoid(logits)


def ann_forward(x, w1, b1, w2, b2, w3, b3, *, block_m=2048):
    """x: (B, n_in) f32.  w1:(n_in,128) b1:(1,128) w2:(128,128) b2:(1,128)
    w3:(128,1) b3:(1,1).  Returns (B, 1) f32 sigmoid outputs."""
    B, n_in = x.shape
    H1 = w1.shape[1]
    H2 = w2.shape[1]

    # Batch tile: multiple of 8 (f32 sublane), capped by the 8-aligned batch.
    block_m = max(8, (block_m // 8) * 8)
    tm = min(block_m, ((B + 7) // 8) * 8)
    n_blocks = pl.cdiv(B, tm)
    # NOTE: if block_m is raised past ~8-16K, set vmem_limit_bytes explicitly
    # (double-buffered x/out + two f32 (tm,128) intermediates).

    # One-time weight casts (tiny, done once outside the kernel).
    w1_bf = w1.astype(jnp.bfloat16)
    w2_bf = w2.astype(jnp.bfloat16)
    w3_bf = w3.astype(jnp.bfloat16)                    # (128, 1)
    b3_flat = b3.reshape(-1).astype(jnp.float32)       # (1,) scalar via SMEM

    out = pl.pallas_call(
        ann_kernel,
        out_shape=jax.ShapeDtypeStruct((B, 1), jnp.float32),
        grid=(n_blocks,),
        in_specs=[
            pl.BlockSpec((tm, n_in), lambda i: (i, 0)),      # x tile (pipelined)
            pl.BlockSpec((n_in, H1), lambda i: (0, 0)),      # w1 resident
            pl.BlockSpec((1, H1), lambda i: (0, 0)),         # b1 resident
            pl.BlockSpec((H1, H2), lambda i: (0, 0)),        # w2 resident
            pl.BlockSpec((1, H2), lambda i: (0, 0)),         # b2 resident
            pl.BlockSpec((H2, 1), lambda i: (0, 0)),         # w3 resident
            pl.BlockSpec(memory_space=pltpu.MemorySpace.SMEM),  # b3 scalar
        ],
        out_specs=pl.BlockSpec((tm, 1), lambda i: (i, 0)),
        compiler_params=pltpu.CompilerParams(
            dimension_semantics=("parallel",)),
    )(x, w1_bf, b1, w2_bf, b2, w3_bf, b3_flat)

    return out


def init_linear(key, fan_in, fan_out):
    # PyTorch nn.Linear default init: U(-1/sqrt(fan_in), 1/sqrt(fan_in))
    kw, kb = jax.random.split(key)
    bound = 1.0 / jnp.sqrt(jnp.float32(fan_in))
    w = jax.random.uniform(kw, (fan_in, fan_out), jnp.float32, -bound, bound)
    b = jax.random.uniform(kb, (1, fan_out), jnp.float32, -bound, bound)
    return w, b


if __name__ == "__main__":
    n_inputs = 32
    batch = 16   # block_m=8 below -> 2 grid steps (exercises pipelining / dual-TC)

    key = jax.random.PRNGKey(0)
    kx, k1, k2, k3 = jax.random.split(key, 4)

    x = jax.random.normal(kx, (batch, n_inputs), jnp.float32)
    w1, b1 = init_linear(k1, n_inputs, 128)
    w2, b2 = init_linear(k2, 128, 128)
    w3, b3 = init_linear(k3, 128, 1)

    out = ann_forward(x, w1, b1, w2, b2, w3, b3, block_m=8)
    jax.block_until_ready(out)

    # Reference check (plain JAX, f32). Kernel uses bf16 matmul operands with
    # f32 accumulation, so the tolerance is loosened accordingly (sigmoid also
    # compresses the error); documented difference vs a PyTorch f32 forward.
    ref = jax.nn.sigmoid(
        jnp.maximum(jnp.maximum(x @ w1 + b1, 0.0) @ w2 + b2, 0.0) @ w3 + b3)
    assert out.shape == (batch, 1)
    assert jnp.allclose(out, ref, atol=2e-2, rtol=2e-2), (
        float(jnp.max(jnp.abs(out - ref))))

    print("KERNEL_OK")
</pallas_src>

<mosaic_0001>
module attributes {stable_mosaic.version = 11 : i64} {
  func.func @ann_kernel(%arg0: i32, %arg1: memref<8x32xf32, #tpu.memory_space<vmem>>, %arg2: memref<32x128xbf16, #tpu.memory_space<vmem>>, %arg3: memref<1x128xf32, #tpu.memory_space<vmem>>, %arg4: memref<128x128xbf16, #tpu.memory_space<vmem>>, %arg5: memref<1x128xf32, #tpu.memory_space<vmem>>, %arg6: memref<128x1xbf16, #tpu.memory_space<vmem>>, %arg7: memref<1xf32, #tpu.memory_space<smem>>, %arg8: memref<8x1xf32, #tpu.memory_space<vmem>>) attributes {dimension_semantics = [#tpu.dimension_semantics<parallel>], iteration_bounds = array<i64: 2>, scalar_prefetch = 0 : i64, scratch_operands = 0 : i64, tpu.core_type = #tpu.core_type<tc>, window_params = [{transform_indices = @transform_0, window_bounds = array<i64: 8, 32>}, {pipeline_mode = #tpu.pipeline_mode<synchronous>, transform_indices = @transform_1, window_bounds = array<i64: 32, 128>}, {pipeline_mode = #tpu.pipeline_mode<synchronous>, transform_indices = @transform_2, window_bounds = array<i64: 1, 128>}, {pipeline_mode = #tpu.pipeline_mode<synchronous>, transform_indices = @transform_3, window_bounds = array<i64: 128, 128>}, {pipeline_mode = #tpu.pipeline_mode<synchronous>, transform_indices = @transform_4, window_bounds = array<i64: 1, 128>}, {pipeline_mode = #tpu.pipeline_mode<synchronous>, transform_indices = @transform_5, window_bounds = array<i64: 128, 1>}, {transform_indices = @transform_6, window_bounds = array<i64: 1>}, {transform_indices = @transform_7, window_bounds = array<i64: 8, 1>}]} {
    %c0 = arith.constant 0 : index
    %c0_0 = arith.constant 0 : index
    %0 = vector.load %arg1[%c0, %c0_0] : memref<8x32xf32, #tpu.memory_space<vmem>>, vector<8x32xf32>
    %1 = arith.truncf %0 : vector<8x32xf32> to vector<8x32xbf16>
    %c0_1 = arith.constant 0 : index
    %c0_2 = arith.constant 0 : index
    %2 = vector.load %arg2[%c0_1, %c0_2] : memref<32x128xbf16, #tpu.memory_space<vmem>>, vector<32x128xbf16>
    %cst = arith.constant dense<0.000000e+00> : vector<8x128xf32>
    %3 = tpu.matmul %1, %2, %cst {dimension_numbers = #tpu.dot_dimension_numbers<[1], [0], [0], [1], [0, 0, 1, 1], [], []>} : vector<8x32xbf16>, vector<32x128xbf16>, vector<8x128xf32> -> vector<8x128xf32>
    %c0_3 = arith.constant 0 : index
    %c0_4 = arith.constant 0 : index
    %4 = vector.load %arg3[%c0_3, %c0_4] : memref<1x128xf32, #tpu.memory_space<vmem>>, vector<1x128xf32>
    %5 = vector.broadcast %4 : vector<1x128xf32> to vector<8x128xf32>
    %6 = arith.addf %3, %5 : vector<8x128xf32>
    %cst_5 = arith.constant 0.000000e+00 : f32
    %7 = vector.broadcast %cst_5 : f32 to vector<8x128xf32>
    %8 = arith.maximumf %6, %7 : vector<8x128xf32>
    %9 = arith.truncf %8 : vector<8x128xf32> to vector<8x128xbf16>
    %c0_6 = arith.constant 0 : index
    %c0_7 = arith.constant 0 : index
    %10 = vector.load %arg4[%c0_6, %c0_7] : memref<128x128xbf16, #tpu.memory_space<vmem>>, vector<128x128xbf16>
    %cst_8 = arith.constant dense<0.000000e+00> : vector<8x128xf32>
    %11 = tpu.matmul %9, %10, %cst_8 {dimension_numbers = #tpu.dot_dimension_numbers<[1], [0], [0], [1], [0, 0, 1, 1], [], []>} : vector<8x128xbf16>, vector<128x128xbf16>, vector<8x128xf32> -> vector<8x128xf32>
    %c0_9 = arith.constant 0 : index
    %c0_10 = arith.constant 0 : index
    %12 = vector.load %arg5[%c0_9, %c0_10] : memref<1x128xf32, #tpu.memory_space<vmem>>, vector<1x128xf32>
    %13 = vector.broadcast %12 : vector<1x128xf32> to vector<8x128xf32>
    %14 = arith.addf %11, %13 : vector<8x128xf32>
    %cst_11 = arith.constant 0.000000e+00 : f32
    %15 = vector.broadcast %cst_11 : f32 to vector<8x128xf32>
    %16 = arith.maximumf %14, %15 : vector<8x128xf32>
    %17 = arith.truncf %16 : vector<8x128xf32> to vector<8x128xbf16>
    %c0_12 = arith.constant 0 : index
    %c0_13 = arith.constant 0 : index
    %18 = vector.load %arg6[%c0_12, %c0_13] : memref<128x1xbf16, #tpu.memory_space<vmem>>, vector<128x1xbf16>
    %cst_14 = arith.constant dense<0.000000e+00> : vector<8x1xf32>
    %19 = tpu.matmul %17, %18, %cst_14 {dimension_numbers = #tpu.dot_dimension_numbers<[1], [0], [0], [1], [0, 0, 1, 1], [], []>} : vector<8x128xbf16>, vector<128x1xbf16>, vector<8x1xf32> -> vector<8x1xf32>
    %c0_15 = arith.constant 0 : index
    %20 = memref.load %arg7[%c0_15] : memref<1xf32, #tpu.memory_space<smem>>
    %21 = vector.broadcast %20 : f32 to vector<8x1xf32>
    %22 = arith.addf %19, %21 : vector<8x1xf32>
    %23 = arith.negf %22 : vector<8x1xf32>
    %24 = math.exp %23 : vector<8x1xf32>
    %cst_16 = arith.constant 1.000000e+00 : f32
    %25 = vector.broadcast %cst_16 : f32 to vector<8x1xf32>
    %26 = arith.addf %25, %24 : vector<8x1xf32>
    %27 = arith.divf %25, %26 : vector<8x1xf32>
    %c0_17 = arith.constant 0 : index
    %c0_18 = arith.constant 0 : index
    %28 = vector.load %arg8[%c0_17, %c0_18] : memref<8x1xf32, #tpu.memory_space<vmem>>, vector<8x1xf32>
    tpu.vector_store %arg8[%c0_17, %c0_18], %27 {strides = array<i32>} : memref<8x1xf32, #tpu.memory_space<vmem>>, vector<8x1xf32>,
    return
  }
  func.func @transform_0(%arg0: i32) -> (i32, i32) {
    %c0_i32 = arith.constant 0 : i32
    %c0_i32_0 = arith.constant 0 : i32
    return %arg0, %c0_i32 : i32, i32
  }
  func.func @transform_1(%arg0: i32) -> (i32, i32) {
    %c0_i32 = arith.constant 0 : i32
    %c0_i32_0 = arith.constant 0 : i32
    %c0_i32_1 = arith.constant 0 : i32
    return %c0_i32, %c0_i32_0 : i32, i32
  }
  func.func @transform_2(%arg0: i32) -> (i32, i32) {
    %c0_i32 = arith.constant 0 : i32
    %c0_i32_0 = arith.constant 0 : i32
    %c0_i32_1 = arith.constant 0 : i32
    return %c0_i32, %c0_i32_0 : i32, i32
  }
  func.func @transform_3(%arg0: i32) -> (i32, i32) {
    %c0_i32 = arith.constant 0 : i32
    %c0_i32_0 = arith.constant 0 : i32
    %c0_i32_1 = arith.constant 0 : i32
    return %c0_i32, %c0_i32_0 : i32, i32
  }
  func.func @transform_4(%arg0: i32) -> (i32, i32) {
    %c0_i32 = arith.constant 0 : i32
    %c0_i32_0 = arith.constant 0 : i32
    %c0_i32_1 = arith.constant 0 : i32
    return %c0_i32, %c0_i32_0 : i32, i32
  }
  func.func @transform_5(%arg0: i32) -> (i32, i32) {
    %c0_i32 = arith.constant 0 : i32
    %c0_i32_0 = arith.constant 0 : i32
    %c0_i32_1 = arith.constant 0 : i32
    return %c0_i32, %c0_i32_0 : i32, i32
  }
  func.func @transform_6(%arg0: i32) -> i32 {
    %c0_i32 = arith.constant 0 : i32
    %c0_i32_0 = arith.constant 0 : i32
    return %c0_i32 : i32
  }
  func.func @transform_7(%arg0: i32) -> (i32, i32) {
    %c0_i32 = arith.constant 0 : i32
    %c0_i32_0 = arith.constant 0 : i32
    return %arg0, %c0_i32 : i32, i32
  }
}

</mosaic_0001>

<llo_original>
// kernel: tpu_custom_call.1
$region0: #{tpu_custom_call.1}
  #allocation0 [shape = 'u32[]', space=smem, size = 0x4, offset = 0x4, fixed_abs, tag = 'smem constant byte address 0x4 - core index']
  #allocation1 [shape = 'u32[72,128]{1,0:T(1,128)}', space=vmem, size = 0x9000, scoped, tag = 'internal scratch']
  #allocation2 [shape = 'f32[1]{0:T(128)S(6)}', space=smem, size = 0x200, scoped, tag = 'scoped memory for tpu_custom_call.1']
  %s0 = inlined_call_operand.hbm [shape: f32[16,32], index: 0, kind: input, shape index: {}]
  %s1 = inlined_call_operand.hbm [shape: bf16[32,128], index: 1, kind: input, shape index: {}]
  %s2 = inlined_call_operand.vmem [shape: f32[1,128], index: 2, kind: input, shape index: {}]
  %s3 = inlined_call_operand.vmem [shape: bf16[128,128], index: 3, kind: input, shape index: {}]
  %s4 = inlined_call_operand.vmem [shape: f32[1,128], index: 4, kind: input, shape index: {}]
  %s5 = inlined_call_operand.vmem [shape: bf16[128,1], index: 5, kind: input, shape index: {}]
  %s6 = inlined_call_operand.<no memory space> [shape: f32[1], index: 6, kind: input, shape index: {}]
  %s7 = inlined_call_operand.vmem [shape: f32[16,1], index: 7, kind: output, shape index: {}]
  %s8 = sld [smem:[#allocation0]]
  $region69: #{tpu_custom_call.1} parent=0
    _
  %s10 = ssub.s32 1, %s8
  %s11 = scalar_select 0, %s10, %s8
  %12 = sst [smem:[#allocation2]] %s6
  $region1: #{tpu_custom_call.1} parent=0
    #allocation3 [shape = 'u8[8192]{0}', space=vmem, size = 0x2000, scoped, tag = 'input window, operand 0']
    #allocation4 [shape = 's32[2]{0}', space=sflag, size = 0x8, scoped, tag = 'scoped memory for tpu_custom_call.1']
    #allocation5 [shape = 'u8[8192]{0}', space=vmem, size = 0x2000, scoped, tag = 'input window, operand 1, single buffered']
    #allocation6 [shape = 's32[1]{0}', space=sflag, size = 0x4, scoped, tag = 'scoped memory for tpu_custom_call.1']
    %13 = vsyncpa [#allocation4], 0
    %s14 = scalar_lea.sflag [#allocation4], 1
    %15 = vsyncpa %s14, 0
    %16 = vsyncpa [#allocation6], 0
    loop: start=0, step=1, limit=4
    $region2: #{tpu_custom_call.1} parent=1 // loop_pre_header
      _
    $region3: #{tpu_custom_call.1} parent=1 // loop_header
      %s18 = sphi 0, %s22
      %p19 = scmp.ge.s32.totalorder %s18, 4
      %s28 = sphi 0, %s30
      %s31 = sphi 0, %s28
      %s32 = sphi 0, %s31
      %s48 = sphi 0, %s32
      %s52 = sphi 0, %s52
      %s54 = sphi 0, %s52
      %s55 = sphi 0, %s54
      %s69 = sphi 0, %s55
      %s73 = sphi 0, %s73
      %s75 = sphi 0, %s73
      %s76 = sphi 0, %s75
      %s90 = sphi 0, %s76
      %s94 = sphi 0, %s94
      %s96 = sphi 0, %s94
      %s97 = sphi 0, %s96
      %s111 = sphi 0, %s97
      %s115 = sphi 0, %s115
      %s117 = sphi 0, %s115
      %s118 = sphi 0, %s117
      %s132 = sphi 0, %s118
      %s136 = sphi 0, %s136
      %s138 = sphi 0, %s136
      %s139 = sphi 0, %s138
      %s153 = sphi 0, %s139
      %s157 = sphi 0, %s157
      %s159 = sphi 0, %s157
      %s160 = sphi 0, %s159
      %s174 = sphi 0, %s160
      %s180 = sphi 0, %s182
      %s183 = sphi 0, %s180
      %s184 = sphi 0, %s183
      %s200 = sphi 0, %s184
    $region4: #{tpu_custom_call.1} parent=1 // loop_header_branch
      %21 = sbr.rel (%p19) target = $region8
    $region5: #{tpu_custom_call.1} parent=1 // loop_body
      %s23 = ssub.s32 %s18, 1
      %s24 = ssub.s32 %s18, 2
      %s25 = sadd.s32 %s18, 1
      %s26 = ssub.s32 %s18, %s25
      %p27 = scmp.eq.s32.totalorder %s26, 0
      %s29 = sadd.s32 %s28, 1
      %s30 = scalar_select %p27, %s28, %s29
      %p33 = pneg %p27
      %p34 = scmp.eq.s32.totalorder %s18, 1
      %p35 = por %p33, %p34
      %p36 = scmp.ne.s32.totalorder %s28, %s31
      %p37 = scmp.eq.s32.totalorder %s18, 0
      %p38 = por %p36, %p37
      %p39 = scmp.ne.s32.totalorder %s28, %s31
      %p40 = scmp.eq.s32.totalorder %s23, 1
      %p41 = por %p39, %p40
      %p42 = scmp.ne.s32.totalorder %s31, %s32
      %p43 = scmp.eq.s32.totalorder %s23, 0
      %p44 = por %p42, %p43
      %p45 = scmp.ne.s32.totalorder %s31, %s32
      %p46 = scmp.eq.s32.totalorder %s24, 1
      %p47 = por %p45, %p46
      %p49 = scmp.ne.s32.totalorder %s32, %s48
      %p50 = scmp.eq.s32.totalorder %s24, 0
      %p51 = por %p49, %p50
      %s53 = sadd.s32 %s52, 1
      %p56 = scmp.eq.s32.totalorder %s18, 1
      %p57 = scmp.ne.s32.totalorder %s52, %s54
      %p58 = scmp.eq.s32.totalorder %s18, 0
      %p59 = por %p57, %p58
      %p60 = scmp.ne.s32.totalorder %s52, %s54
      %p61 = scmp.eq.s32.totalorder %s23, 1
      %p62 = por %p60, %p61
      %p63 = scmp.ne.s32.totalorder %s54, %s55
      %p64 = scmp.eq.s32.totalorder %s23, 0
      %p65 = por %p63, %p64
      %p66 = scmp.ne.s32.totalorder %s54, %s55
      %p67 = scmp.eq.s32.totalorder %s24, 1
      %p68 = por %p66, %p67
      %p70 = scmp.ne.s32.totalorder %s55, %s69
      %p71 = scmp.eq.s32.totalorder %s24, 0
      %p72 = por %p70, %p71
      %s74 = sadd.s32 %s73, 1
      %p77 = scmp.eq.s32.totalorder %s18, 1
      %p78 = scmp.ne.s32.totalorder %s73, %s75
      %p79 = scmp.eq.s32.totalorder %s18, 0
      %p80 = por %p78, %p79
      %p81 = scmp.ne.s32.totalorder %s73, %s75
      %p82 = scmp.eq.s32.totalorder %s23, 1
      %p83 = por %p81, %p82
      %p84 = scmp.ne.s32.totalorder %s75, %s76
      %p85 = scmp.eq.s32.totalorder %s23, 0
      %p86 = por %p84, %p85
      %p87 = scmp.ne.s32.totalorder %s75, %s76
      %p88 = scmp.eq.s32.totalorder %s24, 1
      %p89 = por %p87, %p88
      %p91 = scmp.ne.s32.totalorder %s76, %s90
      %p92 = scmp.eq.s32.totalorder %s24, 0
      %p93 = por %p91, %p92
      %s95 = sadd.s32 %s94, 1
      %p98 = scmp.eq.s32.totalorder %s18, 1
      %p99 = scmp.ne.s32.totalorder %s94, %s96
      %p100 = scmp.eq.s32.totalorder %s18, 0
      %p101 = por %p99, %p100
      %p102 = scmp.ne.s32.totalorder %s94, %s96
      %p103 = scmp.eq.s32.totalorder %s23, 1
      %p104 = por %p102, %p103
      %p105 = scmp.ne.s32.totalorder %s96, %s97
      %p106 = scmp.eq.s32.totalorder %s23, 0
      %p107 = por %p105, %p106
      %p108 = scmp.ne.s32.totalorder %s96, %s97
      %p109 = scmp.eq.s32.totalorder %s24, 1
      %p110 = por %p108, %p109
      %p112 = scmp.ne.s32.totalorder %s97, %s111
      %p113 = scmp.eq.s32.totalorder %s24, 0
      %p114 = por %p112, %p113
      %s116 = sadd.s32 %s115, 1
      %p119 = scmp.eq.s32.totalorder %s18, 1
      %p120 = scmp.ne.s32.totalorder %s115, %s117
      %p121 = scmp.eq.s32.totalorder %s18, 0
      %p122 = por %p120, %p121
      %p123 = scmp.ne.s32.totalorder %s115, %s117
      %p124 = scmp.eq.s32.totalorder %s23, 1
      %p125 = por %p123, %p124
      %p126 = scmp.ne.s32.totalorder %s117, %s118
      %p127 = scmp.eq.s32.totalorder %s23, 0
      %p128 = por %p126, %p127
      %p129 = scmp.ne.s32.totalorder %s117, %s118
      %p130 = scmp.eq.s32.totalorder %s24, 1
      %p131 = por %p129, %p130
      %p133 = scmp.ne.s32.totalorder %s118, %s132
      %p134 = scmp.eq.s32.totalorder %s24, 0
      %p135 = por %p133, %p134
      %s137 = sadd.s32 %s136, 1
      %p140 = scmp.eq.s32.totalorder %s18, 1
      %p141 = scmp.ne.s32.totalorder %s136, %s138
      %p142 = scmp.eq.s32.totalorder %s18, 0
      %p143 = por %p141, %p142
      %p144 = scmp.ne.s32.totalorder %s136, %s138
      %p145 = scmp.eq.s32.totalorder %s23, 1
      %p146 = por %p144, %p145
      %p147 = scmp.ne.s32.totalorder %s138, %s139
      %p148 = scmp.eq.s32.totalorder %s23, 0
      %p149 = por %p147, %p148
      %p150 = scmp.ne.s32.totalorder %s138, %s139
      %p151 = scmp.eq.s32.totalorder %s24, 1
      %p152 = por %p150, %p151
      %p154 = scmp.ne.s32.totalorder %s139, %s153
      %p155 = scmp.eq.s32.totalorder %s24, 0
      %p156 = por %p154, %p155
      %s158 = sadd.s32 %s157, 1
      %p161 = scmp.eq.s32.totalorder %s18, 1
      %p162 = scmp.ne.s32.totalorder %s157, %s159
      %p163 = scmp.eq.s32.totalorder %s18, 0
      %p164 = por %p162, %p163
      %p165 = scmp.ne.s32.totalorder %s157, %s159
      %p166 = scmp.eq.s32.totalorder %s23, 1
      %p167 = por %p165, %p166
      %p168 = scmp.ne.s32.totalorder %s159, %s160
      %p169 = scmp.eq.s32.totalorder %s23, 0
      %p170 = por %p168, %p169
      %p171 = scmp.ne.s32.totalorder %s159, %s160
      %p172 = scmp.eq.s32.totalorder %s24, 1
      %p173 = por %p171, %p172
      %p175 = scmp.ne.s32.totalorder %s160, %s174
      %p176 = scmp.eq.s32.totalorder %s24, 0
      %p177 = por %p175, %p176
      %s178 = ssub.s32 %s18, %s25
      %p179 = scmp.eq.s32.totalorder %s178, 0
      %s181 = sadd.s32 %s180, 1
      %s182 = scalar_select %p179, %s180, %s181
      %p185 = pneg %p179
      %p186 = scmp.eq.s32.totalorder %s18, 1
      %p187 = por %p185, %p186
      %p188 = scmp.ne.s32.totalorder %s180, %s183
      %p189 = scmp.eq.s32.totalorder %s18, 0
      %p190 = por %p188, %p189
      %p191 = scmp.ne.s32.totalorder %s180, %s183
      %p192 = scmp.eq.s32.totalorder %s23, 1
      %p193 = por %p191, %p192
      %p194 = scmp.ne.s32.totalorder %s183, %s184
      %p195 = scmp.eq.s32.totalorder %s23, 0
      %p196 = por %p194, %p195
      %p197 = scmp.ne.s32.totalorder %s183, %s184
      %p198 = scmp.eq.s32.totalorder %s24, 1
      %p199 = por %p197, %p198
      %p201 = scmp.ne.s32.totalorder %s184, %s200
      %p202 = scmp.eq.s32.totalorder %s24, 0
      %p203 = por %p201, %p202
      %p204 = scmp.le.s32.totalorder 1, %s18
      %p205 = scmp.lt.s32.totalorder %s18, 3
      %p206 = pnand %p204, %p205
      %p207 = pneg %p206
      // Predicated region
      $region9: #{tpu_custom_call.1} parent=5 // pred_check
        _
      $region10: #{tpu_custom_call.1} parent=5 // pred_check_branch
        %209 = sbr.rel (%p206) target = $region12
      $region11: #{tpu_custom_call.1} parent=5 // pred_region
        %s210 = ssub.s32 %s18, 1
        // Predicated region
        $region13: #{tpu_custom_call.1} parent=11 // pred_check
          %p211 = pneg %p65
        $region14: #{tpu_custom_call.1} parent=11 // pred_check_branch
          %213 = sbr.rel (%p211) target = $region16
        $region15: #{tpu_custom_call.1} parent=11 // pred_region
          %215 = vsyncadd [#allocation6], 0
          %s216 = sshll.u32 %s1, 4
          %s217 = int_to_ptr.hbm [resolvable:$true] %s216
          %s218 = sshll.u32 [#allocation5], 4
          %s219 = int_to_ptr.vmem [resolvable:$true] %s218
          %224 = dma.hbm_to_vmem [thread:$0]  %s217, 256, %s219, [#allocation6], 64, 64, 4
        $region16: #{tpu_custom_call.1} parent=11 // pred_fallthru
          _
        // Predicated region
        $region17: #{tpu_custom_call.1} parent=11 // pred_check
          %p225 = pneg %p86
        $region18: #{tpu_custom_call.1} parent=11 // pred_check_branch
          %227 = sbr.rel (%p225) target = $region20
        $region19: #{tpu_custom_call.1} parent=11 // pred_region
          _
        $region20: #{tpu_custom_call.1} parent=11 // pred_fallthru
          _
        // Predicated region
        $region21: #{tpu_custom_call.1} parent=11 // pred_check
          %p228 = pneg %p107
        $region22: #{tpu_custom_call.1} parent=11 // pred_check_branch
          %230 = sbr.rel (%p228) target = $region24
        $region23: #{tpu_custom_call.1} parent=11 // pred_region
          _
        $region24: #{tpu_custom_call.1} parent=11 // pred_fallthru
          _
        // Predicated region
        $region25: #{tpu_custom_call.1} parent=11 // pred_check
          %p231 = pneg %p128
        $region26: #{tpu_custom_call.1} parent=11 // pred_check_branch
          %233 = sbr.rel (%p231) target = $region28
        $region27: #{tpu_custom_call.1} parent=11 // pred_region
          _
        $region28: #{tpu_custom_call.1} parent=11 // pred_fallthru
          _
        // Predicated region
        $region29: #{tpu_custom_call.1} parent=11 // pred_check
          %p234 = pneg %p149
        $region30: #{tpu_custom_call.1} parent=11 // pred_check_branch
          %236 = sbr.rel (%p234) target = $region32
        $region31: #{tpu_custom_call.1} parent=11 // pred_region
          _
        $region32: #{tpu_custom_call.1} parent=11 // pred_fallthru
          _
        // Predicated region
        $region33: #{tpu_custom_call.1} parent=11 // pred_check
          %p237 = pneg %p170
        $region34: #{tpu_custom_call.1} parent=11 // pred_check_branch
          %239 = sbr.rel (%p237) target = $region36
        $region35: #{tpu_custom_call.1} parent=11 // pred_region
          _
        $region36: #{tpu_custom_call.1} parent=11 // pred_fallthru
          _
      $region12: #{tpu_custom_call.1} parent=5 // pred_fallthru
        _
      %p240 = scmp.lt.s32.totalorder %s18, 2
      // Predicated region
      $region37: #{tpu_custom_call.1} parent=5 // pred_check
        %p241 = pneg %p240
      $region38: #{tpu_custom_call.1} parent=5 // pred_check_branch
        %243 = sbr.rel (%p241) target = $region40
      $region39: #{tpu_custom_call.1} parent=5 // pred_region
        // Predicated region
        $region41: #{tpu_custom_call.1} parent=39 // pred_check
          %p244 = pneg %p38
        $region42: #{tpu_custom_call.1} parent=39 // pred_check_branch
          %246 = sbr.rel (%p244) target = $region44
        $region43: #{tpu_custom_call.1} parent=39 // pred_region
          %s247 = sand.u32 %s28, 1
          %s248 = scalar_lea.sflag [#allocation4], %s247
          %s249 = sand.u32 %s28, 1
          %s250 = smul.addr %s249, 8
          %s251 = scalar_lea.vmem [#allocation3], %s250
          %253 = vsyncadd %s248, 0
          %s254 = smul.addr %s18, 8
          %s255 = scalar_lea.hbm %s0, %s254
          %s257 = sshll.u32 %s255, 4
          %s258 = int_to_ptr.hbm [resolvable:$true] %s257
          %s259 = sshll.u32 %s251, 4
          %s260 = int_to_ptr.vmem [resolvable:$true] %s259
          %262 = dma.hbm_to_vmem [thread:$0]  %s258, 128, %s260, %s248
        $region44: #{tpu_custom_call.1} parent=39 // pred_fallthru
          _
      $region40: #{tpu_custom_call.1} parent=5 // pred_fallthru
        _
      %p263 = scmp.le.s32.totalorder 1, %s18
      %p264 = scmp.lt.s32.totalorder %s18, 3
      %p265 = pnand %p263, %p264
      %p266 = pneg %p265
      // Predicated region
      $region45: #{tpu_custom_call.1} parent=5 // pred_check
        _
      $region46: #{tpu_custom_call.1} parent=5 // pred_check_branch
        %268 = sbr.rel (%p265) target = $region48
      $region47: #{tpu_custom_call.1} parent=5 // pred_region
        %s269 = ssub.s32 %s18, 1
        %s270 = sand.u32 %s31, 1
        %s271 = scalar_lea.sflag [#allocation4], %s270
        %s272 = sand.u32 %s31, 1
        %s273 = smul.addr %s272, 8
        %s274 = scalar_lea.vmem [#allocation3], %s273
        // Predicated region
        $region49: #{tpu_custom_call.1} parent=47 // pred_check
          %p275 = pneg %p44
        $region50: #{tpu_custom_call.1} parent=47 // pred_check_branch
          %277 = sbr.rel (%p275) target = $region52
        $region51: #{tpu_custom_call.1} parent=47 // pred_region
          %279 = dma.done %s271, 128
        $region52: #{tpu_custom_call.1} parent=47 // pred_fallthru
          _
        // Predicated region
        $region53: #{tpu_custom_call.1} parent=47 // pred_check
          %p280 = pneg %p65
        $region54: #{tpu_custom_call.1} parent=47 // pred_check_branch
          %282 = sbr.rel (%p280) target = $region56
        $region55: #{tpu_custom_call.1} parent=47 // pred_region
          %284 = dma.done [#allocation6], 256
        $region56: #{tpu_custom_call.1} parent=47 // pred_fallthru
          _
        %s285 = sand.u32 %s31, 1
        %s286 = scalar_lea.sflag [#allocation4], %s285
        %s287 = sand.u32 %s31, 1
        %s288 = smul.addr %s287, 8
        %s289 = scalar_lea.vmem [#allocation3], %s288
        %p290 = pneg %p44
        %p291 = pneg %p41
        %p292 = pneg %p65
        %p293 = pneg %p62
        %p294 = pneg %p86
        %p295 = pneg %p83
        %p296 = pneg %p107
        %p297 = pneg %p104
        %p298 = pneg %p128
        %p299 = pneg %p125
        %p300 = pneg %p149
        %p301 = pneg %p146
        %p302 = pneg %p170
        %p303 = pneg %p167
        %p304 = pneg %p196
        %p305 = pneg %p193
        %p306 = scmp.lt.s32.totalorder %s23, 1
        %s307 = scalar_select %p306, %s23, 1
        %s308 = smul.addr %s307, 8
        %s309 = scalar_lea.vmem %s7, %s308
        %p310 = scmp.lt.s32.totalorder %s23, 1
        %s311 = scalar_select %p310, %s23, 1
        %s312 = smul.addr %s311, 8
        %s313 = scalar_lea.vmem %s7, %s312
        %v315 = vld [vmem:[%s274] sm:$0xff]
        %v316 = vpack.c.bf16 %v315, %v315
        %v317 = vld [vmem:[#allocation5] sm:$0xf]
        %v318 = vld [vmem:[#allocation5 + $0x4] sm:$0xf]
        %v319 = vld [vmem:[#allocation5 + $0x8] sm:$0xf]
        %v320 = vld [vmem:[#allocation5 + $0xc] sm:$0xf]
        %v321 = vld [vmem:[%s2] sm:$0x1]
        %v323 = vperm.slane %v321, 0
        %v329 = vunpack.c.l.b16 %v317
        %v330 = vunpack.c.l.b16 %v318
        %v331 = vunpack.c.l.b16 %v319
        %v332 = vunpack.c.l.b16 %v320
        %v333 = vpack.c.b16 %v330, %v329
        %v334 = vpack.c.b16 %v332, %v331
        %vm337 = vcmask 261120
        %v339 = vsel %vm337, %v316, 0
        %341 = vmatpush.bf16.msra.mxu0 0
        %342 = vmatpush.bf16.msra.mxu0 0
        %343 = vmatpush.bf16.msra.mxu0 0
        %344 = vmatpush.bf16.msra.mxu0 0
        %345 = vmatpush.bf16.msra.mxu0 0
        %346 = vmatpush.bf16.msra.mxu0 0
        %347 = vmatpush.bf16.msra.mxu0 %v334
        %348 = vmatpush.bf16.msra.mxu0 %v333
        %349 = vmatmul.bf16.gmra.mxu0 %v339
        %v350 = vpop.f32.mrf.mxu0
        %v351 = vadd.f32 %v323, %v350
        %v352 = vpop.f32.mrf.mxu0
        %353 = vdwg.mxu0
        %v354 = vmax.f32 %v351, 0.0
        %v355 = vpack.c.bf16 %v354, %v354
        %v356 = vld [vmem:[%s3] sm:$0xf]
        %v357 = vld [vmem:[%s3 + $0x4] sm:$0xf]
        %v358 = vld [vmem:[%s3 + $0x8] sm:$0xf]
        %v359 = vld [vmem:[%s3 + $0xc] sm:$0xf]
        %v360 = vld [vmem:[%s3 + $0x10] sm:$0xf]
        %v361 = vld [vmem:[%s3 + $0x14] sm:$0xf]
        %v362 = vld [vmem:[%s3 + $0x18] sm:$0xf]
        %v363 = vld [vmem:[%s3 + $0x1c] sm:$0xf]
        %v364 = vld [vmem:[%s3 + $0x20] sm:$0xf]
        %v365 = vld [vmem:[%s3 + $0x24] sm:$0xf]
        %v366 = vld [vmem:[%s3 + $0x28] sm:$0xf]
        %v367 = vld [vmem:[%s3 + $0x2c] sm:$0xf]
        %v368 = vld [vmem:[%s3 + $0x30] sm:$0xf]
        %v369 = vld [vmem:[%s3 + $0x34] sm:$0xf]
        %v370 = vld [vmem:[%s3 + $0x38] sm:$0xf]
        %v371 = vld [vmem:[%s3 + $0x3c] sm:$0xf]
        %v372 = vld [vmem:[%s4] sm:$0x1]
        %v374 = vperm.slane %v372, 0
        %v392 = vunpack.c.l.b16 %v356
        %v393 = vunpack.c.l.b16 %v357
        %v394 = vunpack.c.l.b16 %v358
        %v395 = vunpack.c.l.b16 %v359
        %v396 = vunpack.c.l.b16 %v360
        %v397 = vunpack.c.l.b16 %v361
        %v398 = vunpack.c.l.b16 %v362
        %v399 = vunpack.c.l.b16 %v363
        %v400 = vunpack.c.l.b16 %v364
        %v401 = vunpack.c.l.b16 %v365
        %v402 = vunpack.c.l.b16 %v366
        %v403 = vunpack.c.l.b16 %v367
        %v404 = vunpack.c.l.b16 %v368
        %v405 = vunpack.c.l.b16 %v369
        %v406 = vunpack.c.l.b16 %v370
        %v407 = vunpack.c.l.b16 %v371
        %v408 = vpack.c.b16 %v393, %v392
        %v409 = vpack.c.b16 %v395, %v394
        %v410 = vpack.c.b16 %v397, %v396
        %v411 = vpack.c.b16 %v399, %v398
        %v412 = vpack.c.b16 %v401, %v400
        %v413 = vpack.c.b16 %v403, %v402
        %v414 = vpack.c.b16 %v405, %v404
        %v415 = vpack.c.b16 %v407, %v406
        %424 = vmatpush.bf16.msra.mxu0 %v415
        %425 = vmatpush.bf16.msra.mxu0 %v414
        %426 = vmatpush.bf16.msra.mxu0 %v413
        %427 = vmatpush.bf16.msra.mxu0 %v412
        %428 = vmatpush.bf16.msra.mxu0 %v411
        %429 = vmatpush.bf16.msra.mxu0 %v410
        %430 = vmatpush.bf16.msra.mxu0 %v409
        %431 = vmatpush.bf16.msra.mxu0 %v408
        %432 = vmatmul.bf16.gmra.mxu0 %v355
        %v433 = vpop.f32.mrf.mxu0
        %v434 = vadd.f32 %v374, %v433
        %v435 = vpop.f32.mrf.mxu0
        %436 = vdwg.mxu0
        %v437 = vmax.f32 %v434, 0.0
        %v438 = vpack.c.bf16 %v437, %v437
        %v439 = vld [vmem:[%s5] sm:$0xf]
        %v440 = vld [vmem:[%s5 + $0x4] sm:$0xf]
        %v441 = vld [vmem:[%s5 + $0x8] sm:$0xf]
        %v442 = vld [vmem:[%s5 + $0xc] sm:$0xf]
        %v443 = vld [vmem:[%s5 + $0x10] sm:$0xf]
        %v444 = vld [vmem:[%s5 + $0x14] sm:$0xf]
        %v445 = vld [vmem:[%s5 + $0x18] sm:$0xf]
        %v446 = vld [vmem:[%s5 + $0x1c] sm:$0xf]
        %v447 = vld [vmem:[%s5 + $0x20] sm:$0xf]
        %v448 = vld [vmem:[%s5 + $0x24] sm:$0xf]
        %v449 = vld [vmem:[%s5 + $0x28] sm:$0xf]
        %v450 = vld [vmem:[%s5 + $0x2c] sm:$0xf]
        %v451 = vld [vmem:[%s5 + $0x30] sm:$0xf]
        %v452 = vld [vmem:[%s5 + $0x34] sm:$0xf]
        %v453 = vld [vmem:[%s5 + $0x38] sm:$0xf]
        %v454 = vld [vmem:[%s5 + $0x3c] sm:$0xf]
        %s455 = sld [smem:[#allocation2]]
        %v456 = vstv %s455
        %v473 = vunpack.c.l.b16 %v439
        %v474 = vunpack.c.l.b16 %v440
        %v475 = vunpack.c.l.b16 %v441
        %v476 = vunpack.c.l.b16 %v442
        %v477 = vunpack.c.l.b16 %v443
        %v478 = vunpack.c.l.b16 %v444
        %v479 = vunpack.c.l.b16 %v445
        %v480 = vunpack.c.l.b16 %v446
        %v481 = vunpack.c.l.b16 %v447
        %v482 = vunpack.c.l.b16 %v448
        %v483 = vunpack.c.l.b16 %v449
        %v484 = vunpack.c.l.b16 %v450
        %v485 = vunpack.c.l.b16 %v451
        %v486 = vunpack.c.l.b16 %v452
        %v487 = vunpack.c.l.b16 %v453
        %v488 = vunpack.c.l.b16 %v454
        %v489 = vpack.c.b16 %v474, %v473
        %v490 = vpack.c.b16 %v476, %v475
        %v491 = vpack.c.b16 %v478, %v477
        %v492 = vpack.c.b16 %v480, %v479
        %v493 = vpack.c.b16 %v482, %v481
        %v494 = vpack.c.b16 %v484, %v483
        %v495 = vpack.c.b16 %v486, %v485
        %v496 = vpack.c.b16 %v488, %v487
        %505 = vmatpush.bf16.msra.mxu0 %v496
        %506 = vmatpush.bf16.msra.mxu0 %v495
        %507 = vmatpush.bf16.msra.mxu0 %v494
        %508 = vmatpush.bf16.msra.mxu0 %v493
        %509 = vmatpush.bf16.msra.mxu0 %v492
        %510 = vmatpush.bf16.msra.mxu0 %v491
        %511 = vmatpush.bf16.msra.mxu0 %v490
        %512 = vmatpush.bf16.msra.mxu0 %v489
        %513 = vmatmul.bf16.gmra.mxu0 %v438
        %v514 = vpop.f32.mrf.mxu0
        %v515 = vadd.f32 %v456, %v514
        %v516 = vpop.f32.mrf.mxu0
        %517 = vdwg.mxu0
        %v518 = vxor.u32 %v515, 2147483648
        %v519 = vmul.f32 %v518, 1.442695
        %v520 = vpow.pop %v519
        %v521 = vadd.f32 %v520, 1.0
        %v522 = vrcp.pop %v521
        %v523 = vmul.f32 %v521, %v522
        %v524 = vsub.f32 1.0, %v523
        %v525 = vmul.f32 %v522, %v524
        %v526 = vadd.f32 %v522, %v525
        %vm527 = vweird.f32 %v521
        %vm528 = vweird.f32 %v522
        %vm529 = vmor %vm527, %vm528
        %v530 = vsel %vm529, %v522, %v526
        %v531 = vand.u32 2147483647, %v521
        %vm532 = vcmp.eq.f32.partialorder %v531, 8.507059e+37
        %v533 = vand.u32 %v521, 2147483648
        %v534 = vor.u32 1.1754944e-38, %v533
        %v535 = vsel %vm532, %v534, %v530
        %v536 = vmul.f32 1.0, %v535
        %vm537 = vcmask 7168
        %538 = vst.msk [vmem:[%s313] sm:$0xff] %vm537, %v536
        %p539 = scmp.lt.s32.totalorder %s23, 1
        %s540 = scalar_select %p539, %s23, 1
        %s541 = smul.addr %s540, 8
        %s542 = scalar_lea.vmem %s7, %s541
        // Predicated region
        $region57: #{tpu_custom_call.1} parent=47 // pred_check
          %p543 = pneg %p193
        $region58: #{tpu_custom_call.1} parent=47 // pred_check_branch
          %545 = sbr.rel (%p543) target = $region60
        $region59: #{tpu_custom_call.1} parent=47 // pred_region
          _
        $region60: #{tpu_custom_call.1} parent=47 // pred_fallthru
          _
      $region48: #{tpu_custom_call.1} parent=5 // pred_fallthru
        _
      %p546 = scmp.le.s32.totalorder 2, %s18
      // Predicated region
      $region61: #{tpu_custom_call.1} parent=5 // pred_check
        %p547 = pneg %p546
      $region62: #{tpu_custom_call.1} parent=5 // pred_check_branch
        %549 = sbr.rel (%p547) target = $region64
      $region63: #{tpu_custom_call.1} parent=5 // pred_region
        %s550 = ssub.s32 %s18, 2
        // Predicated region
        $region65: #{tpu_custom_call.1} parent=63 // pred_check
          %p551 = pneg %p199
        $region66: #{tpu_custom_call.1} parent=63 // pred_check_branch
          %553 = sbr.rel (%p551) target = $region68
        $region67: #{tpu_custom_call.1} parent=63 // pred_region
          %p554 = scmp.lt.s32.totalorder %s24, 1
          %s555 = scalar_select %p554, %s24, 1
          %s556 = smul.addr %s555, 8
          %s557 = scalar_lea.vmem %s7, %s556
        $region68: #{tpu_custom_call.1} parent=63 // pred_fallthru
          _
      $region64: #{tpu_custom_call.1} parent=5 // pred_fallthru
        _
    $region6: #{tpu_custom_call.1} parent=1 // loop_footer
      %s22 = sadd.s32 1, %s18
    $region7: #{tpu_custom_call.1} parent=1 // loop_footer_branch
      %17 = sbr.rel target = $region3
    $region8: #{tpu_custom_call.1} parent=1 // loop_exit
      _
    %558 = vsyncpa [#allocation4], 1
    %s559 = scalar_lea.sflag [#allocation4], 1
    %560 = vsyncpa %s559, 1
    %561 = vsyncpa [#allocation6], 1

</llo_original>
